<compile_context>
chip_gen: v5e
topology: v5e:2x2
jax: 0.10.0
libtpu: 0.0.40
codegen_flags: <defaults>
</compile_context>

<pallas_src>
import jax
import jax.numpy as jnp
from jax.experimental import pallas as pl
from jax.experimental.pallas import tpu as pltpu

_LANE = 128     # TPU lane width (only used for the optional lane-dense pad).
_GRANULE = 16   # row granule: multiple of 8 (f32) and 16 (packed bf16).


def _round_up(x, m):
    return ((x + m - 1) // m) * m


def _mlp_kernel(x_ref, w1_ref, b1_ref, w2_ref, b2_ref, w3_ref, b3_ref, o_ref):
    cdt = w1_ref.dtype  # compute dtype for the MXU (bf16 by default, or f32)
    # fc1 + ReLU  (MXU in compute dtype, f32 accumulation; bias/ReLU in f32)
    h1 = jnp.dot(x_ref[...], w1_ref[...], preferred_element_type=jnp.float32)
    h1 = jnp.maximum(h1 + b1_ref[...], 0.0)
    # fc2 + ReLU
    h2 = jnp.dot(h1.astype(cdt), w2_ref[...], preferred_element_type=jnp.float32)
    h2 = jnp.maximum(h2 + b2_ref[...], 0.0)
    # fc3 (output padded to a sublane-aligned width; padding cols are zero)
    out = jnp.dot(h2.astype(cdt), w3_ref[...], preferred_element_type=jnp.float32)
    out = out + b3_ref[...]
    o_ref[...] = out.astype(o_ref.dtype)


def prepare_params(params, compute_dtype=jnp.bfloat16, pad_out_to_lanes=False):
    """One-time layout prep (hoisted out of the per-call wrapper):
    transpose PyTorch [out,in] weights to [in,out] in the compute dtype,
    keep biases in f32 as [1,out], and zero-pad fc3 to a sublane-aligned
    (or optionally lane-dense) output width."""
    w1 = jnp.asarray(params["fc1_w"]).T.astype(compute_dtype)   # [in_feat, h1]
    w2 = jnp.asarray(params["fc2_w"]).T.astype(compute_dtype)   # [h1, h2]
    w3 = jnp.asarray(params["fc3_w"]).T.astype(compute_dtype)   # [h2, out]
    b1 = jnp.asarray(params["fc1_b"]).astype(jnp.float32)[None, :]
    b2 = jnp.asarray(params["fc2_b"]).astype(jnp.float32)[None, :]
    b3 = jnp.asarray(params["fc3_b"]).astype(jnp.float32)[None, :]

    out_size = int(w3.shape[1])
    if pad_out_to_lanes:
        out_pad = _round_up(max(out_size, _LANE), _LANE)
    else:
        out_pad = _round_up(out_size, 8)
    w3p = jnp.zeros((w3.shape[0], out_pad), w3.dtype).at[:, :out_size].set(w3)
    b3p = jnp.zeros((1, out_pad), b3.dtype).at[:, :out_size].set(b3)

    return {"w1": w1, "b1": b1, "w2": w2, "b2": b2,
            "w3": w3p, "b3": b3p, "out_size": out_size}


def velocity_estimator_forward(x, kp, tile_m=2048):
    """x: [B, history_len*input_size]. kp: output of prepare_params.
    Wrap call sites in jax.jit so the input cast and output slice/upcast
    fuse with the pallas_call."""
    B, in_feat = x.shape
    out_size = kp["out_size"]
    out_pad = kp["w3"].shape[1]
    in_dtype = x.dtype
    cdt = kp["w1"].dtype
    x_c = x.astype(cdt)

    # Row tile: big enough to amortize per-grid-step overhead (~0.35us), rounded
    # to the 16-row granule, and capped so grid_m >= 2 when B is large (keeps
    # both v7x TensorCores busy).  Ragged last tiles are masked by Pallas, so
    # no wrapper-side padding of x is needed.
    if B <= _GRANULE:
        tm = B  # single block equal to the full array dims (always legal)
    else:
        tm = _round_up(min(tile_m, B), _GRANULE)
        tm = min(tm, _round_up(pl.cdiv(B, 2), _GRANULE))
    grid_m = pl.cdiv(B, tm)

    # Weights/biases: full-array blocks with a constant index_map -> DMA'd once,
    # resident in VMEM across all batch tiles.
    def resident(a):
        return pl.BlockSpec(a.shape, lambda i: (0,) * a.ndim)

    h1 = kp["w1"].shape[1]
    h2 = kp["w2"].shape[1]
    flops = 2 * B * (in_feat * h1 + h1 * h2 + h2 * out_pad)
    param_bytes = sum(int(kp[k].size) * kp[k].dtype.itemsize
                      for k in ("w1", "b1", "w2", "b2", "w3", "b3"))
    bytes_accessed = (int(x_c.size) * x_c.dtype.itemsize
                      + B * out_pad * jnp.dtype(cdt).itemsize
                      + param_bytes)

    out = pl.pallas_call(
        _mlp_kernel,
        out_shape=jax.ShapeDtypeStruct((B, out_pad), cdt),
        grid=(grid_m,),
        in_specs=[
            pl.BlockSpec((tm, in_feat), lambda i: (i, 0)),
            resident(kp["w1"]), resident(kp["b1"]),
            resident(kp["w2"]), resident(kp["b2"]),
            resident(kp["w3"]), resident(kp["b3"]),
        ],
        out_specs=pl.BlockSpec((tm, out_pad), lambda i: (i, 0)),
        compiler_params=pltpu.CompilerParams(
            dimension_semantics=("parallel",)),
        cost_estimate=pl.CostEstimate(
            flops=flops, transcendentals=0, bytes_accessed=bytes_accessed),
    )(x_c, kp["w1"], kp["b1"], kp["w2"], kp["b2"], kp["w3"], kp["b3"])

    return out[:, :out_size].astype(in_dtype)


def init_params(key, input_size, hidden_size, hidden_size2, output_size, history_len):
    """Deterministic synthetic init (matches nn.Linear shapes / init bounds)."""
    in_feat = history_len * input_size
    ks = jax.random.split(key, 6)

    def lin(kw, kb, fan_in, fan_out):
        bound = 1.0 / jnp.sqrt(fan_in)
        w = jax.random.uniform(kw, (fan_out, fan_in), jnp.float32, -bound, bound)
        b = jax.random.uniform(kb, (fan_out,), jnp.float32, -bound, bound)
        return w, b

    w1, b1 = lin(ks[0], ks[1], in_feat, hidden_size)
    w2, b2 = lin(ks[2], ks[3], hidden_size, hidden_size2)
    w3, b3 = lin(ks[4], ks[5], hidden_size2, output_size)
    return {"fc1_w": w1, "fc1_b": b1,
            "fc2_w": w2, "fc2_b": b2,
            "fc3_w": w3, "fc3_b": b3}


def reference_forward(x, p):
    h1 = jnp.maximum(x @ p["fc1_w"].T + p["fc1_b"], 0.0)
    h2 = jnp.maximum(h1 @ p["fc2_w"].T + p["fc2_b"], 0.0)
    return h2 @ p["fc3_w"].T + p["fc3_b"]


if __name__ == "__main__":
    # Shapes consistent with the module: proprioceptive input of size 4,
    # history of 8 steps, two hidden layers, 3-D velocity output.
    input_size, history_len = 4, 8
    hidden_size, hidden_size2, output_size = 64, 32, 3

    key = jax.random.PRNGKey(0)
    k_x1, k_x2, k_p = jax.random.split(key, 3)
    params = init_params(k_p, input_size, hidden_size, hidden_size2,
                         output_size, history_len)

    # One-time layout prep (hoisted out of forward): bf16 fast path + f32 path
    # for a tight numerical check.
    kp_bf16 = prepare_params(params)                                  # default bf16
    kp_f32 = prepare_params(params, compute_dtype=jnp.float32)

    fwd_bf16 = jax.jit(lambda x: velocity_estimator_forward(x, kp_bf16))
    fwd_f32 = jax.jit(lambda x: velocity_estimator_forward(x, kp_f32))

    in_feat = history_len * input_size

    # Case 1: small batch (single full-array block, no grid raggedness).
    x1 = jax.random.normal(k_x1, (8, in_feat), jnp.float32)
    ref1 = reference_forward(x1, params)

    out1_f32 = jax.block_until_ready(fwd_f32(x1))
    assert out1_f32.shape == (8, output_size)
    assert jnp.allclose(out1_f32, ref1, atol=1e-4, rtol=1e-4), "f32 mismatch (B=8)"

    out1_bf16 = jax.block_until_ready(fwd_bf16(x1))
    assert out1_bf16.shape == (8, output_size)
    assert jnp.allclose(out1_bf16, ref1, atol=5e-2, rtol=5e-2), "bf16 mismatch (B=8)"

    # Case 2: batch that exercises the grid (2 tiles, ragged last tile masked
    # by Pallas -- no wrapper-side padding of x).
    x2 = jax.random.normal(k_x2, (300, in_feat), jnp.float32)
    ref2 = reference_forward(x2, params)

    out2_f32 = jax.block_until_ready(fwd_f32(x2))
    assert out2_f32.shape == (300, output_size)
    assert jnp.allclose(out2_f32, ref2, atol=1e-4, rtol=1e-4), "f32 mismatch (B=300)"

    out2_bf16 = jax.block_until_ready(fwd_bf16(x2))
    assert out2_bf16.shape == (300, output_size)
    assert jnp.allclose(out2_bf16, ref2, atol=5e-2, rtol=5e-2), "bf16 mismatch (B=300)"

    print("KERNEL_OK")
</pallas_src>

<mosaic_0001>
module attributes {stable_mosaic.version = 11 : i64} {
  func.func @_mlp_kernel(%arg0: i32, %arg1: memref<8x32xf32, #tpu.memory_space<vmem>>, %arg2: memref<32x64xf32, #tpu.memory_space<vmem>>, %arg3: memref<1x64xf32, #tpu.memory_space<vmem>>, %arg4: memref<64x32xf32, #tpu.memory_space<vmem>>, %arg5: memref<1x32xf32, #tpu.memory_space<vmem>>, %arg6: memref<32x8xf32, #tpu.memory_space<vmem>>, %arg7: memref<1x8xf32, #tpu.memory_space<vmem>>, %arg8: memref<8x8xf32, #tpu.memory_space<vmem>>) attributes {dimension_semantics = [#tpu.dimension_semantics<parallel>], iteration_bounds = array<i64: 1>, scalar_prefetch = 0 : i64, scratch_operands = 0 : i64, tpu.core_type = #tpu.core_type<tc>, window_params = [{transform_indices = @transform_0, window_bounds = array<i64: 8, 32>}, {pipeline_mode = #tpu.pipeline_mode<synchronous>, transform_indices = @transform_1, window_bounds = array<i64: 32, 64>}, {pipeline_mode = #tpu.pipeline_mode<synchronous>, transform_indices = @transform_2, window_bounds = array<i64: 1, 64>}, {pipeline_mode = #tpu.pipeline_mode<synchronous>, transform_indices = @transform_3, window_bounds = array<i64: 64, 32>}, {pipeline_mode = #tpu.pipeline_mode<synchronous>, transform_indices = @transform_4, window_bounds = array<i64: 1, 32>}, {pipeline_mode = #tpu.pipeline_mode<synchronous>, transform_indices = @transform_5, window_bounds = array<i64: 32, 8>}, {pipeline_mode = #tpu.pipeline_mode<synchronous>, transform_indices = @transform_6, window_bounds = array<i64: 1, 8>}, {transform_indices = @transform_7, window_bounds = array<i64: 8, 8>}]} {
    %c0 = arith.constant 0 : index
    %c0_0 = arith.constant 0 : index
    %0 = vector.load %arg1[%c0, %c0_0] : memref<8x32xf32, #tpu.memory_space<vmem>>, vector<8x32xf32>
    %c0_1 = arith.constant 0 : index
    %c0_2 = arith.constant 0 : index
    %1 = vector.load %arg2[%c0_1, %c0_2] : memref<32x64xf32, #tpu.memory_space<vmem>>, vector<32x64xf32>
    %cst = arith.constant dense<0.000000e+00> : vector<8x64xf32>
    %2 = tpu.matmul %0, %1, %cst {dimension_numbers = #tpu.dot_dimension_numbers<[1], [0], [0], [1], [0, 0, 1, 1], [], []>} : vector<8x32xf32>, vector<32x64xf32>, vector<8x64xf32> -> vector<8x64xf32>
    %c0_3 = arith.constant 0 : index
    %c0_4 = arith.constant 0 : index
    %3 = vector.load %arg3[%c0_3, %c0_4] : memref<1x64xf32, #tpu.memory_space<vmem>>, vector<1x64xf32>
    %4 = vector.broadcast %3 : vector<1x64xf32> to vector<8x64xf32>
    %5 = arith.addf %2, %4 : vector<8x64xf32>
    %cst_5 = arith.constant 0.000000e+00 : f32
    %6 = vector.broadcast %cst_5 : f32 to vector<8x64xf32>
    %7 = arith.maximumf %5, %6 : vector<8x64xf32>
    %c0_6 = arith.constant 0 : index
    %c0_7 = arith.constant 0 : index
    %8 = vector.load %arg4[%c0_6, %c0_7] : memref<64x32xf32, #tpu.memory_space<vmem>>, vector<64x32xf32>
    %cst_8 = arith.constant dense<0.000000e+00> : vector<8x32xf32>
    %9 = tpu.matmul %7, %8, %cst_8 {dimension_numbers = #tpu.dot_dimension_numbers<[1], [0], [0], [1], [0, 0, 1, 1], [], []>} : vector<8x64xf32>, vector<64x32xf32>, vector<8x32xf32> -> vector<8x32xf32>
    %c0_9 = arith.constant 0 : index
    %c0_10 = arith.constant 0 : index
    %10 = vector.load %arg5[%c0_9, %c0_10] : memref<1x32xf32, #tpu.memory_space<vmem>>, vector<1x32xf32>
    %11 = vector.broadcast %10 : vector<1x32xf32> to vector<8x32xf32>
    %12 = arith.addf %9, %11 : vector<8x32xf32>
    %cst_11 = arith.constant 0.000000e+00 : f32
    %13 = vector.broadcast %cst_11 : f32 to vector<8x32xf32>
    %14 = arith.maximumf %12, %13 : vector<8x32xf32>
    %c0_12 = arith.constant 0 : index
    %c0_13 = arith.constant 0 : index
    %15 = vector.load %arg6[%c0_12, %c0_13] : memref<32x8xf32, #tpu.memory_space<vmem>>, vector<32x8xf32>
    %cst_14 = arith.constant dense<0.000000e+00> : vector<8x8xf32>
    %16 = tpu.matmul %14, %15, %cst_14 {dimension_numbers = #tpu.dot_dimension_numbers<[1], [0], [0], [1], [0, 0, 1, 1], [], []>} : vector<8x32xf32>, vector<32x8xf32>, vector<8x8xf32> -> vector<8x8xf32>
    %c0_15 = arith.constant 0 : index
    %c0_16 = arith.constant 0 : index
    %17 = vector.load %arg7[%c0_15, %c0_16] : memref<1x8xf32, #tpu.memory_space<vmem>>, vector<1x8xf32>
    %18 = vector.broadcast %17 : vector<1x8xf32> to vector<8x8xf32>
    %19 = arith.addf %16, %18 : vector<8x8xf32>
    %c0_17 = arith.constant 0 : index
    %c0_18 = arith.constant 0 : index
    %20 = vector.load %arg8[%c0_17, %c0_18] : memref<8x8xf32, #tpu.memory_space<vmem>>, vector<8x8xf32>
    tpu.vector_store %arg8[%c0_17, %c0_18], %19 {strides = array<i32>} : memref<8x8xf32, #tpu.memory_space<vmem>>, vector<8x8xf32>,
    return
  }
  func.func @transform_0(%arg0: i32) -> (i32, i32) {
    %c0_i32 = arith.constant 0 : i32
    %c0_i32_0 = arith.constant 0 : i32
    return %arg0, %c0_i32 : i32, i32
  }
  func.func @transform_1(%arg0: i32) -> (i32, i32) {
    %c0_i32 = arith.constant 0 : i32
    %c0_i32_0 = arith.constant 0 : i32
    %c0_i32_1 = arith.constant 0 : i32
    return %c0_i32, %c0_i32_0 : i32, i32
  }
  func.func @transform_2(%arg0: i32) -> (i32, i32) {
    %c0_i32 = arith.constant 0 : i32
    %c0_i32_0 = arith.constant 0 : i32
    %c0_i32_1 = arith.constant 0 : i32
    return %c0_i32, %c0_i32_0 : i32, i32
  }
  func.func @transform_3(%arg0: i32) -> (i32, i32) {
    %c0_i32 = arith.constant 0 : i32
    %c0_i32_0 = arith.constant 0 : i32
    %c0_i32_1 = arith.constant 0 : i32
    return %c0_i32, %c0_i32_0 : i32, i32
  }
  func.func @transform_4(%arg0: i32) -> (i32, i32) {
    %c0_i32 = arith.constant 0 : i32
    %c0_i32_0 = arith.constant 0 : i32
    %c0_i32_1 = arith.constant 0 : i32
    return %c0_i32, %c0_i32_0 : i32, i32
  }
  func.func @transform_5(%arg0: i32) -> (i32, i32) {
    %c0_i32 = arith.constant 0 : i32
    %c0_i32_0 = arith.constant 0 : i32
    %c0_i32_1 = arith.constant 0 : i32
    return %c0_i32, %c0_i32_0 : i32, i32
  }
  func.func @transform_6(%arg0: i32) -> (i32, i32) {
    %c0_i32 = arith.constant 0 : i32
    %c0_i32_0 = arith.constant 0 : i32
    %c0_i32_1 = arith.constant 0 : i32
    return %c0_i32, %c0_i32_0 : i32, i32
  }
  func.func @transform_7(%arg0: i32) -> (i32, i32) {
    %c0_i32 = arith.constant 0 : i32
    %c0_i32_0 = arith.constant 0 : i32
    return %arg0, %c0_i32 : i32, i32
  }
}

</mosaic_0001>

<llo_original>
// kernel: _lambda_.1
$region0: #{_lambda_.1}
  #allocation0 [shape = 'u32[]', space=smem, size = 0x4, offset = 0x4, fixed_abs, tag = 'smem constant byte address 0x4 - core index']
  #allocation1 [shape = 'u32[72,128]{1,0:T(1,128)}', space=vmem, size = 0x9000, scoped, tag = 'internal scratch']
  %s0 = inlined_call_operand.hbm [shape: f32[8,32], index: 0, kind: input, shape index: {}]
  %s1 = inlined_call_operand.hbm [shape: f32[32,64], index: 1, kind: input, shape index: {}]
  %s2 = inlined_call_operand.hbm [shape: f32[1,64], index: 2, kind: input, shape index: {}]
  %s3 = inlined_call_operand.hbm [shape: f32[64,32], index: 3, kind: input, shape index: {}]
  %s4 = inlined_call_operand.vmem [shape: f32[1,32], index: 4, kind: input, shape index: {}]
  %s5 = inlined_call_operand.hbm [shape: f32[32,8], index: 5, kind: input, shape index: {}]
  %s6 = inlined_call_operand.vmem [shape: f32[1,8], index: 6, kind: input, shape index: {}]
  %s7 = inlined_call_operand.vmem [shape: f32[8,8], index: 7, kind: output, shape index: {}]
  %s8 = sld [smem:[#allocation0]]
  $region58: #{_lambda_.1} parent=0
    _
  %s10 = ssub.s32 1, %s8
  %s11 = scalar_select 0, %s10, %s8
  $region1: #{_lambda_.1} parent=0
    #allocation2 [shape = 'u8[4096]{0}', space=vmem, size = 0x1000, scoped, tag = 'input window, operand 0, single buffered']
    #allocation3 [shape = 's32[1]{0}', space=sflag, size = 0x4, scoped, tag = 'scoped memory for _lambda_.1']
    #allocation4 [shape = 'u8[16384]{0}', space=vmem, size = 0x4000, scoped, tag = 'input window, operand 1, single buffered']
    #allocation5 [shape = 's32[1]{0}', space=sflag, size = 0x4, scoped, tag = 'scoped memory for _lambda_.1']
    #allocation6 [shape = 'u8[512]{0}', space=vmem, size = 0x400, scoped, tag = 'input window, operand 2, single buffered']
    #allocation7 [shape = 'u8[32768]{0}', space=vmem, size = 0x8000, scoped, tag = 'input window, operand 3, single buffered']
    #allocation8 [shape = 's32[1]{0}', space=sflag, size = 0x4, scoped, tag = 'scoped memory for _lambda_.1']
    #allocation9 [shape = 'u8[16384]{0}', space=vmem, size = 0x4000, scoped, tag = 'input window, operand 5, single buffered']
    %12 = vsyncpa [#allocation3], 0
    %13 = vsyncpa [#allocation5], 0
    %14 = vsyncpa [#allocation8], 0
    // Predicated region
    $region2: #{_lambda_.1} parent=1 // pred_check
      _
    $region3: #{_lambda_.1} parent=1 // pred_check_branch
      %16 = sbr.rel (0) target = $region5
    $region4: #{_lambda_.1} parent=1 // pred_region
      %18 = vsyncadd [#allocation3], 0
      %s20 = sshll.u32 %s0, 4
      %s21 = int_to_ptr.hbm [resolvable:$true] %s20
      %s22 = sshll.u32 [#allocation2], 4
      %s23 = int_to_ptr.vmem [resolvable:$true] %s22
      %25 = dma.hbm_to_vmem [thread:$0]  %s21, 128, %s23, [#allocation3]
    $region5: #{_lambda_.1} parent=1 // pred_fallthru
      _
    // Predicated region
    $region6: #{_lambda_.1} parent=1 // pred_check
      _
    $region7: #{_lambda_.1} parent=1 // pred_check_branch
      %27 = sbr.rel (0) target = $region9
    $region8: #{_lambda_.1} parent=1 // pred_region
      %29 = vsyncadd [#allocation5], 0
      %s30 = sshll.u32 %s1, 4
      %s31 = int_to_ptr.hbm [resolvable:$true] %s30
      %s32 = sshll.u32 [#allocation4], 4
      %s33 = int_to_ptr.vmem [resolvable:$true] %s32
      %38 = dma.hbm_to_vmem [thread:$0]  %s31, 512, %s33, [#allocation5], 128, 128, 8
    $region9: #{_lambda_.1} parent=1 // pred_fallthru
      _
    // Predicated region
    $region10: #{_lambda_.1} parent=1 // pred_check
      _
    $region11: #{_lambda_.1} parent=1 // pred_check_branch
      %40 = sbr.rel (0) target = $region13
    $region12: #{_lambda_.1} parent=1 // pred_region
      %42 = vsyncadd [#allocation5], 0
      %s44 = sshll.u32 %s2, 4
      %s45 = int_to_ptr.hbm [resolvable:$true] %s44
      %s46 = sshll.u32 [#allocation6], 4
      %s47 = int_to_ptr.vmem [resolvable:$true] %s46
      %49 = dma.hbm_to_vmem [thread:$0]  %s45, 16, %s47, [#allocation5]
    $region13: #{_lambda_.1} parent=1 // pred_fallthru
      _
    // Predicated region
    $region14: #{_lambda_.1} parent=1 // pred_check
      _
    $region15: #{_lambda_.1} parent=1 // pred_check_branch
      %51 = sbr.rel (0) target = $region17
    $region16: #{_lambda_.1} parent=1 // pred_region
      %53 = vsyncadd [#allocation8], 0
      %s54 = sshll.u32 %s3, 4
      %s55 = int_to_ptr.hbm [resolvable:$true] %s54
      %s56 = sshll.u32 [#allocation7], 4
      %s57 = int_to_ptr.vmem [resolvable:$true] %s56
      %62 = dma.hbm_to_vmem [thread:$0]  %s55, 1024, %s57, [#allocation8], 128, 128, 8
    $region17: #{_lambda_.1} parent=1 // pred_fallthru
      _
    // Predicated region
    $region18: #{_lambda_.1} parent=1 // pred_check
      _
    $region19: #{_lambda_.1} parent=1 // pred_check_branch
      %64 = sbr.rel (0) target = $region21
    $region20: #{_lambda_.1} parent=1 // pred_region
      _
    $region21: #{_lambda_.1} parent=1 // pred_fallthru
      _
    // Predicated region
    $region22: #{_lambda_.1} parent=1 // pred_check
      _
    $region23: #{_lambda_.1} parent=1 // pred_check_branch
      %66 = sbr.rel (0) target = $region25
    $region24: #{_lambda_.1} parent=1 // pred_region
      %68 = vsyncadd [#allocation8], 0
      %s69 = sshll.u32 %s5, 4
      %s70 = int_to_ptr.hbm [resolvable:$true] %s69
      %s71 = sshll.u32 [#allocation9], 4
      %s72 = int_to_ptr.vmem [resolvable:$true] %s71
      %77 = dma.hbm_to_vmem [thread:$0]  %s70, 512, %s72, [#allocation8], 128, 128, 8
    $region25: #{_lambda_.1} parent=1 // pred_fallthru
      _
    // Predicated region
    $region26: #{_lambda_.1} parent=1 // pred_check
      _
    $region27: #{_lambda_.1} parent=1 // pred_check_branch
      %79 = sbr.rel (0) target = $region29
    $region28: #{_lambda_.1} parent=1 // pred_region
      _
    $region29: #{_lambda_.1} parent=1 // pred_fallthru
      _
    // Predicated region
    $region30: #{_lambda_.1} parent=1 // pred_check
      _
    $region31: #{_lambda_.1} parent=1 // pred_check_branch
      %81 = sbr.rel (0) target = $region33
    $region32: #{_lambda_.1} parent=1 // pred_region
      %83 = dma.done [#allocation3], 128
    $region33: #{_lambda_.1} parent=1 // pred_fallthru
      _
    // Predicated region
    $region34: #{_lambda_.1} parent=1 // pred_check
      _
    $region35: #{_lambda_.1} parent=1 // pred_check_branch
      %85 = sbr.rel (0) target = $region37
    $region36: #{_lambda_.1} parent=1 // pred_region
      %87 = dma.done [#allocation5], 512
    $region37: #{_lambda_.1} parent=1 // pred_fallthru
      _
    // Predicated region
    $region38: #{_lambda_.1} parent=1 // pred_check
      _
    $region39: #{_lambda_.1} parent=1 // pred_check_branch
      %89 = sbr.rel (0) target = $region41
    $region40: #{_lambda_.1} parent=1 // pred_region
      %91 = dma.done [#allocation5], 16
    $region41: #{_lambda_.1} parent=1 // pred_fallthru
      _
    // Predicated region
    $region42: #{_lambda_.1} parent=1 // pred_check
      _
    $region43: #{_lambda_.1} parent=1 // pred_check_branch
      %93 = sbr.rel (0) target = $region45
    $region44: #{_lambda_.1} parent=1 // pred_region
      %95 = dma.done [#allocation8], 1024
    $region45: #{_lambda_.1} parent=1 // pred_fallthru
      _
    // Predicated region
    $region46: #{_lambda_.1} parent=1 // pred_check
      _
    $region47: #{_lambda_.1} parent=1 // pred_check_branch
      %97 = sbr.rel (0) target = $region49
    $region48: #{_lambda_.1} parent=1 // pred_region
      %99 = dma.done [#allocation8], 512
    $region49: #{_lambda_.1} parent=1 // pred_fallthru
      _
    %v100 = vld [vmem:[#allocation2] sm:$0xff]
    %v101 = vld [vmem:[#allocation4] sm:$0xff]
    %v102 = vld [vmem:[#allocation4 + $0x8] sm:$0xff]
    %v103 = vld [vmem:[#allocation4 + $0x10] sm:$0xff]
    %v104 = vld [vmem:[#allocation4 + $0x18] sm:$0xff]
    %v105 = vld [vmem:[#allocation6] sm:$0x1]
    %v107 = vperm.slane %v105, 0
    %vm109 = vcmask 261120
    %v111 = vsel %vm109, %v100, 0
    %113 = vmatpush.msra.mxu0 0.0
    %114 = vmatpush.msra.mxu0 0.0
    %115 = vmatpush.msra.mxu0 0.0
    %116 = vmatpush.msra.mxu0 0.0
    %117 = vmatpush.msra.mxu0 0.0
    %118 = vmatpush.msra.mxu0 0.0
    %119 = vmatpush.msra.mxu0 0.0
    %120 = vmatpush.msra.mxu0 0.0
    %121 = vmatpush.msra.mxu0 0.0
    %122 = vmatpush.msra.mxu0 0.0
    %123 = vmatpush.msra.mxu0 0.0
    %124 = vmatpush.msra.mxu0 0.0
    %125 = vmatpush.msra.mxu0 %v104
    %126 = vmatpush.msra.mxu0 %v103
    %127 = vmatpush.msra.mxu0 %v102
    %128 = vmatpush.msra.mxu0 %v101
    %129 = vmatmul.f32.gmra.mxu0 %v111
    %v130 = vpop.f32.mrf.mxu0
    %v131 = vadd.f32 %v107, %v130
    %132 = vdwg.mxu0
    %v133 = vmax.f32 %v131, 0.0
    %v134 = vld [vmem:[#allocation7] sm:$0xff]
    %v135 = vld [vmem:[#allocation7 + $0x8] sm:$0xff]
    %v136 = vld [vmem:[#allocation7 + $0x10] sm:$0xff]
    %v137 = vld [vmem:[#allocation7 + $0x18] sm:$0xff]
    %v138 = vld [vmem:[#allocation7 + $0x20] sm:$0xff]
    %v139 = vld [vmem:[#allocation7 + $0x28] sm:$0xff]
    %v140 = vld [vmem:[#allocation7 + $0x30] sm:$0xff]
    %v141 = vld [vmem:[#allocation7 + $0x38] sm:$0xff]
    %v142 = vld [vmem:[%s4] sm:$0x1]
    %v144 = vperm.slane %v142, 0
    %vm146 = vcmask 523264
    %v148 = vsel %vm146, %v133, 0
    %150 = vmatpush.msra.mxu0 0.0
    %151 = vmatpush.msra.mxu0 0.0
    %152 = vmatpush.msra.mxu0 0.0
    %153 = vmatpush.msra.mxu0 0.0
    %154 = vmatpush.msra.mxu0 0.0
    %155 = vmatpush.msra.mxu0 0.0
    %156 = vmatpush.msra.mxu0 0.0
    %157 = vmatpush.msra.mxu0 0.0
    %158 = vmatpush.msra.mxu0 %v141
    %159 = vmatpush.msra.mxu0 %v140
    %160 = vmatpush.msra.mxu0 %v139
    %161 = vmatpush.msra.mxu0 %v138
    %162 = vmatpush.msra.mxu0 %v137
    %163 = vmatpush.msra.mxu0 %v136
    %164 = vmatpush.msra.mxu0 %v135
    %165 = vmatpush.msra.mxu0 %v134
    %166 = vmatmul.f32.gmra.mxu0 %v148
    %v167 = vpop.f32.mrf.mxu0
    %v168 = vadd.f32 %v144, %v167
    %169 = vdwg.mxu0
    %v170 = vmax.f32 %v168, 0.0
    %v171 = vld [vmem:[#allocation9] sm:$0xff]
    %v172 = vld [vmem:[#allocation9 + $0x8] sm:$0xff]
    %v173 = vld [vmem:[#allocation9 + $0x10] sm:$0xff]
    %v174 = vld [vmem:[#allocation9 + $0x18] sm:$0xff]
    %v175 = vld [vmem:[%s6] sm:$0x1]
    %v177 = vperm.slane %v175, 0
    %v180 = vsel %vm109, %v170, 0
    %182 = vmatpush.msra.mxu0 0.0
    %183 = vmatpush.msra.mxu0 0.0
    %184 = vmatpush.msra.mxu0 0.0
    %185 = vmatpush.msra.mxu0 0.0
    %186 = vmatpush.msra.mxu0 0.0
    %187 = vmatpush.msra.mxu0 0.0
    %188 = vmatpush.msra.mxu0 0.0
    %189 = vmatpush.msra.mxu0 0.0
    %190 = vmatpush.msra.mxu0 0.0
    %191 = vmatpush.msra.mxu0 0.0
    %192 = vmatpush.msra.mxu0 0.0
    %193 = vmatpush.msra.mxu0 0.0
    %194 = vmatpush.msra.mxu0 %v174
    %195 = vmatpush.msra.mxu0 %v173
    %196 = vmatpush.msra.mxu0 %v172
    %197 = vmatpush.msra.mxu0 %v171
    %198 = vmatmul.f32.gmra.mxu0 %v180
    %v199 = vpop.f32.mrf.mxu0
    %v200 = vadd.f32 %v177, %v199
    %201 = vdwg.mxu0
    %vm202 = vcmask 64512
    %203 = vst.msk [vmem:[%s7] sm:$0xff] %vm202, %v200
    // Predicated region
    $region50: #{_lambda_.1} parent=1 // pred_check
      _
    $region51: #{_lambda_.1} parent=1 // pred_check_branch
      %205 = sbr.rel (0) target = $region53
    $region52: #{_lambda_.1} parent=1 // pred_region
      _
    $region53: #{_lambda_.1} parent=1 // pred_fallthru
      _
    // Predicated region
    $region54: #{_lambda_.1} parent=1 // pred_check
      _
    $region55: #{_lambda_.1} parent=1 // pred_check_branch
      %207 = sbr.rel (0) target = $region57
    $region56: #{_lambda_.1} parent=1 // pred_region
      _
    $region57: #{_lambda_.1} parent=1 // pred_fallthru
      _
    %208 = vsyncpa [#allocation3], 1
    %209 = vsyncpa [#allocation5], 1
    %210 = vsyncpa [#allocation8], 1

</llo_original>
